<compile_context>
chip_gen: v6e
topology: v6e:2x2x1
jax: 0.10.0
libtpu: 0.0.40
codegen_flags: <defaults>
</compile_context>

<pallas_src>
import math
import functools

import jax
import jax.numpy as jnp
from jax import lax
from jax.experimental import pallas as pl
from jax.experimental.pallas import tpu as pltpu


def _linear_kernel(x_ref, w_ref, b_ref, o_ref):
    # x: (TB, N), w: (OUT, N), b: (1, OUT) -> o: (TB, OUT)
    x = x_ref[...]
    w = w_ref[...]
    # Contract on the shared N axis of both operands (MXU, f32 accumulate);
    # no explicit transpose materialised.
    out = lax.dot_general(
        x, w,
        dimension_numbers=(((1,), (1,)), ((), ())),
        preferred_element_type=jnp.float32,
    )
    o_ref[...] = (out + b_ref[...]).astype(o_ref.dtype)


def _round_up(x, m):
    return ((x + m - 1) // m) * m


def _choose_row_block(m_pad):
    """Pick a row-block size: multiple of 8, <= 256, >= 2 grid steps when possible."""
    tb = min(256, m_pad)
    if m_pad >= 16 and m_pad // tb < 2:
        tb = m_pad // 2          # split so both TensorCores (v7x) get work
    tb = max(8, (tb // 8) * 8)
    return tb


def crsp_pred(x, weight, bias):
    """Forward pass of CrspPred (nn.Linear semantics on the last dim).

    x:      (..., num_inputs)
    weight: (out_features, num_inputs)   -- PyTorch layout
    bias:   (out_features,)
    returns (..., out_features)
    """
    *lead, n_in = x.shape
    n_out, n_in_w = weight.shape
    assert n_in == n_in_w, "weight / input feature-dim mismatch"

    m = int(math.prod(lead)) if lead else 1
    x2 = x.reshape(m, n_in)

    # Pad rows so every block is a multiple of 8 sublanes and divides evenly.
    m_pad = _round_up(m, 8)
    tb = _choose_row_block(m_pad)
    m_pad = _round_up(m_pad, tb)
    if m_pad != m:
        x2 = jnp.pad(x2, ((0, m_pad - m), (0, 0)))

    bias2 = bias.reshape(1, n_out).astype(jnp.float32)
    weight = weight.astype(x2.dtype)

    grid = (m_pad // tb,)

    grid_spec = pltpu.PrefetchScalarGridSpec(
        num_scalar_prefetch=0,
        grid=grid,
        in_specs=[
            pl.BlockSpec((tb, n_in), lambda i: (i, 0)),      # X rows
            pl.BlockSpec((n_out, n_in), lambda i: (0, 0)),   # weight (resident)
            pl.BlockSpec((1, n_out), lambda i: (0, 0)),      # bias (resident)
        ],
        out_specs=pl.BlockSpec((tb, n_out), lambda i: (i, 0)),
    )

    cost = pl.CostEstimate(
        flops=2 * m_pad * n_in * n_out + m_pad * n_out,
        transcendentals=0,
        bytes_accessed=4 * (m_pad * n_in + n_out * n_in + n_out + m_pad * n_out),
    )

    out = pl.pallas_call(
        _linear_kernel,
        out_shape=jax.ShapeDtypeStruct((m_pad, n_out), x.dtype),
        grid_spec=grid_spec,
        compiler_params=pltpu.CompilerParams(
            dimension_semantics=("parallel",)),
        cost_estimate=cost,
    )(x2, weight, bias2)

    out = out[:m]
    return out.reshape(*lead, n_out) if lead else out.reshape(n_out)


def _reference(x, weight, bias):
    """Pure-JAX reference mirroring nn.Linear."""
    return jnp.einsum("...i,oi->...o", x, weight) + bias


if __name__ == "__main__":
    key = jax.random.PRNGKey(0)
    kx, kw, kb = jax.random.split(key, 3)

    num_inputs = 32
    out_features = 2
    # X: (batch=2, seq=8, num_inputs=32) -> flattened to 16 rows, 2 grid steps.
    X = jax.random.normal(kx, (2, 8, num_inputs), dtype=jnp.float32)

    # Deterministic weights mimicking nn.Linear's default uniform init.
    bound = 1.0 / math.sqrt(num_inputs)
    W = jax.random.uniform(kw, (out_features, num_inputs),
                           minval=-bound, maxval=bound, dtype=jnp.float32)
    b = jax.random.uniform(kb, (out_features,),
                           minval=-bound, maxval=bound, dtype=jnp.float32)

    out = jax.block_until_ready(crsp_pred(X, W, b))
    ref = _reference(X, W, b)

    assert out.shape == (2, 8, out_features), out.shape
    assert jnp.allclose(out, ref, atol=1e-5, rtol=1e-5), "mismatch vs reference"

    # Also exercise a non-multiple-of-8 row count (padding path) and 2-D input.
    X2 = jax.random.normal(kx, (5, num_inputs), dtype=jnp.float32)
    out2 = jax.block_until_ready(crsp_pred(X2, W, b))
    assert out2.shape == (5, out_features)
    assert jnp.allclose(out2, _reference(X2, W, b), atol=1e-5, rtol=1e-5)

    print("KERNEL_OK")
</pallas_src>

<mosaic_0001>
module attributes {stable_mosaic.version = 11 : i64} {
  func.func @_linear_kernel(%arg0: i32, %arg1: memref<8x32xf32, #tpu.memory_space<vmem>>, %arg2: memref<2x32xf32, #tpu.memory_space<vmem>>, %arg3: memref<1x2xf32, #tpu.memory_space<vmem>>, %arg4: memref<8x2xf32, #tpu.memory_space<vmem>>) attributes {dimension_semantics = [#tpu.dimension_semantics<parallel>], iteration_bounds = array<i64: 2>, scalar_prefetch = 0 : i64, scratch_operands = 0 : i64, tpu.core_type = #tpu.core_type<tc>, window_params = [{transform_indices = @transform_0, window_bounds = array<i64: 8, 32>}, {pipeline_mode = #tpu.pipeline_mode<synchronous>, transform_indices = @transform_1, window_bounds = array<i64: 2, 32>}, {pipeline_mode = #tpu.pipeline_mode<synchronous>, transform_indices = @transform_2, window_bounds = array<i64: 1, 2>}, {transform_indices = @transform_3, window_bounds = array<i64: 8, 2>}]} {
    %c0 = arith.constant 0 : index
    %c0_0 = arith.constant 0 : index
    %0 = vector.load %arg1[%c0, %c0_0] : memref<8x32xf32, #tpu.memory_space<vmem>>, vector<8x32xf32>
    %c0_1 = arith.constant 0 : index
    %c0_2 = arith.constant 0 : index
    %1 = vector.load %arg2[%c0_1, %c0_2] : memref<2x32xf32, #tpu.memory_space<vmem>>, vector<2x32xf32>
    %cst = arith.constant dense<0.000000e+00> : vector<8x2xf32>
    %2 = tpu.matmul %0, %1, %cst {dimension_numbers = #tpu.dot_dimension_numbers<[1], [1], [0], [0], [0, 0, 1, 0], [], []>} : vector<8x32xf32>, vector<2x32xf32>, vector<8x2xf32> -> vector<8x2xf32>
    %c0_3 = arith.constant 0 : index
    %c0_4 = arith.constant 0 : index
    %3 = vector.load %arg3[%c0_3, %c0_4] : memref<1x2xf32, #tpu.memory_space<vmem>>, vector<1x2xf32>
    %4 = vector.broadcast %3 : vector<1x2xf32> to vector<8x2xf32>
    %5 = arith.addf %2, %4 : vector<8x2xf32>
    %c0_5 = arith.constant 0 : index
    %c0_6 = arith.constant 0 : index
    %6 = vector.load %arg4[%c0_5, %c0_6] : memref<8x2xf32, #tpu.memory_space<vmem>>, vector<8x2xf32>
    tpu.vector_store %arg4[%c0_5, %c0_6], %5 {strides = array<i32>} : memref<8x2xf32, #tpu.memory_space<vmem>>, vector<8x2xf32>,
    return
  }
  func.func @transform_0(%arg0: i32) -> (i32, i32) {
    %c0_i32 = arith.constant 0 : i32
    %c0_i32_0 = arith.constant 0 : i32
    return %arg0, %c0_i32 : i32, i32
  }
  func.func @transform_1(%arg0: i32) -> (i32, i32) {
    %c0_i32 = arith.constant 0 : i32
    %c0_i32_0 = arith.constant 0 : i32
    %c0_i32_1 = arith.constant 0 : i32
    return %c0_i32, %c0_i32_0 : i32, i32
  }
  func.func @transform_2(%arg0: i32) -> (i32, i32) {
    %c0_i32 = arith.constant 0 : i32
    %c0_i32_0 = arith.constant 0 : i32
    %c0_i32_1 = arith.constant 0 : i32
    return %c0_i32, %c0_i32_0 : i32, i32
  }
  func.func @transform_3(%arg0: i32) -> (i32, i32) {
    %c0_i32 = arith.constant 0 : i32
    %c0_i32_0 = arith.constant 0 : i32
    return %arg0, %c0_i32 : i32, i32
  }
}

</mosaic_0001>

<llo_original>
// kernel: tpu_custom_call.1
$region0: #{tpu_custom_call.1}
  #allocation0 [shape = 'u32[]', space=smem, size = 0x4, offset = 0x4, fixed_abs, tag = 'smem constant byte address 0x4 - core index']
  #allocation1 [shape = 'u32[144,128]{1,0:T(1,128)}', space=vmem, size = 0x12000, scoped, tag = 'internal scratch']
  %s0 = inlined_call_operand.hbm [shape: f32[16,32], index: 0, kind: input, shape index: {}]
  %s1 = inlined_call_operand.hbm [shape: f32[2,32], index: 1, kind: input, shape index: {}]
  %s2 = inlined_call_operand.vmem [shape: f32[1,2], index: 2, kind: input, shape index: {}]
  %s3 = inlined_call_operand.vmem [shape: f32[16,2], index: 3, kind: output, shape index: {}]
  %s4 = sld [smem:[#allocation0]]
  $region53: #{tpu_custom_call.1} parent=0
    _
  %s6 = ssub.s32 1, %s4
  %s7 = scalar_select 0, %s6, %s4
  $region1: #{tpu_custom_call.1} parent=0
    #allocation2 [shape = 'u8[8192]{0}', space=vmem, size = 0x2000, scoped, tag = 'input window, operand 0']
    #allocation3 [shape = 's32[2]{0}', space=sflag, size = 0x8, scoped, tag = 'scoped memory for tpu_custom_call.1']
    #allocation4 [shape = 'u8[1024]{0}', space=vmem, size = 0x400, scoped, tag = 'input window, operand 1, single buffered']
    #allocation5 [shape = 's32[1]{0}', space=sflag, size = 0x4, scoped, tag = 'scoped memory for tpu_custom_call.1']
    %8 = vsyncpa [#allocation3], 0
    %s9 = scalar_lea.sflag [#allocation3], 1
    %10 = vsyncpa %s9, 0
    %11 = vsyncpa [#allocation5], 0
    loop: start=0, step=1, limit=4
    $region2: #{tpu_custom_call.1} parent=1 // loop_pre_header
      _
    $region3: #{tpu_custom_call.1} parent=1 // loop_header
      %s13 = sphi 0, %s17
      %p14 = scmp.ge.s32.totalorder %s13, 4
      %s23 = sphi 0, %s25
      %s26 = sphi 0, %s23
      %s27 = sphi 0, %s26
      %s43 = sphi 0, %s27
      %s47 = sphi 0, %s47
      %s49 = sphi 0, %s47
      %s50 = sphi 0, %s49
      %s64 = sphi 0, %s50
      %s68 = sphi 0, %s68
      %s70 = sphi 0, %s68
      %s71 = sphi 0, %s70
      %s85 = sphi 0, %s71
      %s91 = sphi 0, %s93
      %s94 = sphi 0, %s91
      %s95 = sphi 0, %s94
      %s111 = sphi 0, %s95
    $region4: #{tpu_custom_call.1} parent=1 // loop_header_branch
      %16 = sbr.rel (%p14) target = $region8
    $region5: #{tpu_custom_call.1} parent=1 // loop_body
      %s18 = ssub.s32 %s13, 1
      %s19 = ssub.s32 %s13, 2
      %s20 = sadd.s32 %s13, 1
      %s21 = ssub.s32 %s13, %s20
      %p22 = scmp.eq.s32.totalorder %s21, 0
      %s24 = sadd.s32 %s23, 1
      %s25 = scalar_select %p22, %s23, %s24
      %p28 = pneg %p22
      %p29 = scmp.eq.s32.totalorder %s13, 1
      %p30 = por %p28, %p29
      %p31 = scmp.ne.s32.totalorder %s23, %s26
      %p32 = scmp.eq.s32.totalorder %s13, 0
      %p33 = por %p31, %p32
      %p34 = scmp.ne.s32.totalorder %s23, %s26
      %p35 = scmp.eq.s32.totalorder %s18, 1
      %p36 = por %p34, %p35
      %p37 = scmp.ne.s32.totalorder %s26, %s27
      %p38 = scmp.eq.s32.totalorder %s18, 0
      %p39 = por %p37, %p38
      %p40 = scmp.ne.s32.totalorder %s26, %s27
      %p41 = scmp.eq.s32.totalorder %s19, 1
      %p42 = por %p40, %p41
      %p44 = scmp.ne.s32.totalorder %s27, %s43
      %p45 = scmp.eq.s32.totalorder %s19, 0
      %p46 = por %p44, %p45
      %s48 = sadd.s32 %s47, 1
      %p51 = scmp.eq.s32.totalorder %s13, 1
      %p52 = scmp.ne.s32.totalorder %s47, %s49
      %p53 = scmp.eq.s32.totalorder %s13, 0
      %p54 = por %p52, %p53
      %p55 = scmp.ne.s32.totalorder %s47, %s49
      %p56 = scmp.eq.s32.totalorder %s18, 1
      %p57 = por %p55, %p56
      %p58 = scmp.ne.s32.totalorder %s49, %s50
      %p59 = scmp.eq.s32.totalorder %s18, 0
      %p60 = por %p58, %p59
      %p61 = scmp.ne.s32.totalorder %s49, %s50
      %p62 = scmp.eq.s32.totalorder %s19, 1
      %p63 = por %p61, %p62
      %p65 = scmp.ne.s32.totalorder %s50, %s64
      %p66 = scmp.eq.s32.totalorder %s19, 0
      %p67 = por %p65, %p66
      %s69 = sadd.s32 %s68, 1
      %p72 = scmp.eq.s32.totalorder %s13, 1
      %p73 = scmp.ne.s32.totalorder %s68, %s70
      %p74 = scmp.eq.s32.totalorder %s13, 0
      %p75 = por %p73, %p74
      %p76 = scmp.ne.s32.totalorder %s68, %s70
      %p77 = scmp.eq.s32.totalorder %s18, 1
      %p78 = por %p76, %p77
      %p79 = scmp.ne.s32.totalorder %s70, %s71
      %p80 = scmp.eq.s32.totalorder %s18, 0
      %p81 = por %p79, %p80
      %p82 = scmp.ne.s32.totalorder %s70, %s71
      %p83 = scmp.eq.s32.totalorder %s19, 1
      %p84 = por %p82, %p83
      %p86 = scmp.ne.s32.totalorder %s71, %s85
      %p87 = scmp.eq.s32.totalorder %s19, 0
      %p88 = por %p86, %p87
      %s89 = ssub.s32 %s13, %s20
      %p90 = scmp.eq.s32.totalorder %s89, 0
      %s92 = sadd.s32 %s91, 1
      %s93 = scalar_select %p90, %s91, %s92
      %p96 = pneg %p90
      %p97 = scmp.eq.s32.totalorder %s13, 1
      %p98 = por %p96, %p97
      %p99 = scmp.ne.s32.totalorder %s91, %s94
      %p100 = scmp.eq.s32.totalorder %s13, 0
      %p101 = por %p99, %p100
      %p102 = scmp.ne.s32.totalorder %s91, %s94
      %p103 = scmp.eq.s32.totalorder %s18, 1
      %p104 = por %p102, %p103
      %p105 = scmp.ne.s32.totalorder %s94, %s95
      %p106 = scmp.eq.s32.totalorder %s18, 0
      %p107 = por %p105, %p106
      %p108 = scmp.ne.s32.totalorder %s94, %s95
      %p109 = scmp.eq.s32.totalorder %s19, 1
      %p110 = por %p108, %p109
      %p112 = scmp.ne.s32.totalorder %s95, %s111
      %p113 = scmp.eq.s32.totalorder %s19, 0
      %p114 = por %p112, %p113
      %p115 = scmp.le.s32.totalorder 1, %s13
      %p116 = scmp.lt.s32.totalorder %s13, 3
      %p117 = pnand %p115, %p116
      %p118 = pneg %p117
      // Predicated region
      $region9: #{tpu_custom_call.1} parent=5 // pred_check
        _
      $region10: #{tpu_custom_call.1} parent=5 // pred_check_branch
        %120 = sbr.rel (%p117) target = $region12
      $region11: #{tpu_custom_call.1} parent=5 // pred_region
        %s121 = ssub.s32 %s13, 1
        // Predicated region
        $region13: #{tpu_custom_call.1} parent=11 // pred_check
          %p122 = pneg %p60
        $region14: #{tpu_custom_call.1} parent=11 // pred_check_branch
          %124 = sbr.rel (%p122) target = $region16
        $region15: #{tpu_custom_call.1} parent=11 // pred_region
          %s126 = ssub.s32 32, 32
          %127 = vsyncadd [#allocation5], %s126
          %s129 = sshll.u32 [#allocation4], 4
          %s130 = int_to_ptr.vmem [resolvable:$true] %s129
          %132 = dma.hbm_to_vmem [thread:$0]  %s1, 32, %s130, [#allocation5]
        $region16: #{tpu_custom_call.1} parent=11 // pred_fallthru
          _
        // Predicated region
        $region17: #{tpu_custom_call.1} parent=11 // pred_check
          %p133 = pneg %p81
        $region18: #{tpu_custom_call.1} parent=11 // pred_check_branch
          %135 = sbr.rel (%p133) target = $region20
        $region19: #{tpu_custom_call.1} parent=11 // pred_region
          _
        $region20: #{tpu_custom_call.1} parent=11 // pred_fallthru
          _
      $region12: #{tpu_custom_call.1} parent=5 // pred_fallthru
        _
      %p136 = scmp.lt.s32.totalorder %s13, 2
      // Predicated region
      $region21: #{tpu_custom_call.1} parent=5 // pred_check
        %p137 = pneg %p136
      $region22: #{tpu_custom_call.1} parent=5 // pred_check_branch
        %139 = sbr.rel (%p137) target = $region24
      $region23: #{tpu_custom_call.1} parent=5 // pred_region
        // Predicated region
        $region25: #{tpu_custom_call.1} parent=23 // pred_check
          %p140 = pneg %p33
        $region26: #{tpu_custom_call.1} parent=23 // pred_check_branch
          %142 = sbr.rel (%p140) target = $region28
        $region27: #{tpu_custom_call.1} parent=23 // pred_region
          %s143 = sand.u32 %s23, 1
          %s144 = scalar_lea.sflag [#allocation3], %s143
          %s145 = sand.u32 %s23, 1
          %s146 = smul.addr %s145, 8
          %s147 = scalar_lea.vmem [#allocation2], %s146
          %s149 = ssub.s32 128, 128
          %150 = vsyncadd %s144, %s149
          %s151 = smul.addr %s13, 128
          %s152 = scalar_lea.hbm %s0, %s151
          %s154 = sshll.u32 %s147, 4
          %s155 = int_to_ptr.vmem [resolvable:$true] %s154
          %157 = dma.hbm_to_vmem [thread:$0]  %s152, 128, %s155, %s144
        $region28: #{tpu_custom_call.1} parent=23 // pred_fallthru
          _
      $region24: #{tpu_custom_call.1} parent=5 // pred_fallthru
        _
      %p158 = scmp.le.s32.totalorder 1, %s13
      %p159 = scmp.lt.s32.totalorder %s13, 3
      %p160 = pnand %p158, %p159
      %p161 = pneg %p160
      // Predicated region
      $region29: #{tpu_custom_call.1} parent=5 // pred_check
        _
      $region30: #{tpu_custom_call.1} parent=5 // pred_check_branch
        %163 = sbr.rel (%p160) target = $region32
      $region31: #{tpu_custom_call.1} parent=5 // pred_region
        %s164 = ssub.s32 %s13, 1
        %s165 = sand.u32 %s26, 1
        %s166 = scalar_lea.sflag [#allocation3], %s165
        %s167 = sand.u32 %s26, 1
        %s168 = smul.addr %s167, 8
        %s169 = scalar_lea.vmem [#allocation2], %s168
        // Predicated region
        $region33: #{tpu_custom_call.1} parent=31 // pred_check
          %p170 = pneg %p39
        $region34: #{tpu_custom_call.1} parent=31 // pred_check_branch
          %172 = sbr.rel (%p170) target = $region36
        $region35: #{tpu_custom_call.1} parent=31 // pred_region
          %173 = dma.done %s166, 128
        $region36: #{tpu_custom_call.1} parent=31 // pred_fallthru
          _
        // Predicated region
        $region37: #{tpu_custom_call.1} parent=31 // pred_check
          %p174 = pneg %p60
        $region38: #{tpu_custom_call.1} parent=31 // pred_check_branch
          %176 = sbr.rel (%p174) target = $region40
        $region39: #{tpu_custom_call.1} parent=31 // pred_region
          %177 = dma.done [#allocation5], 32
        $region40: #{tpu_custom_call.1} parent=31 // pred_fallthru
          _
        %s178 = sand.u32 %s26, 1
        %s179 = scalar_lea.sflag [#allocation3], %s178
        %s180 = sand.u32 %s26, 1
        %s181 = smul.addr %s180, 8
        %s182 = scalar_lea.vmem [#allocation2], %s181
        %p183 = pneg %p39
        %p184 = pneg %p36
        %p185 = pneg %p60
        %p186 = pneg %p57
        %p187 = pneg %p81
        %p188 = pneg %p78
        %p189 = pneg %p107
        %p190 = pneg %p104
        %p191 = scmp.lt.s32.totalorder %s18, 1
        %s192 = scalar_select %p191, %s18, 1
        %s193 = smul.addr %s192, 8
        %s194 = scalar_lea.vmem %s3, %s193
        %p195 = scmp.lt.s32.totalorder %s18, 1
        %s196 = scalar_select %p195, %s18, 1
        %s197 = smul.addr %s196, 8
        %s198 = scalar_lea.vmem %s3, %s197
        %v199 = vld [vmem:[%s169] sm:$0xff]
        %v200 = vld [vmem:[#allocation4] sm:$0x3]
        %v201 = vld [vmem:[%s2] sm:$0x1]
        %v203 = vlaneseq
        %v204 = vshrl.u32 %v203, 7
        %v205 = vsub.s32 0, %v204
        %v206 = vrot.slane %v201, %v205
        %vm208 = vcmask 261120
        %v210 = vsel %vm208, %v199, 0
        %v213 = vsel %vm208, %v200, 0
        %215 = vmatprep.subr.mxu0 0.0
        %216 = vmatpush1.xpose.msra.mxu0 0.0
        %217 = vmatprep.subr.mxu0 0.0
        %218 = vmatpush1.xpose.msra.mxu0 0.0
        %219 = vmatprep.subr.mxu0 0.0
        %220 = vmatpush1.xpose.msra.mxu0 0.0
        %221 = vmatprep.subr.mxu0 0.0
        %222 = vmatpush1.xpose.msra.mxu0 0.0
        %223 = vmatprep.subr.mxu0 0.0
        %224 = vmatpush1.xpose.msra.mxu0 0.0
        %225 = vmatprep.subr.mxu0 0.0
        %226 = vmatpush1.xpose.msra.mxu0 0.0
        %227 = vmatprep.subr.mxu0 0.0
        %228 = vmatpush1.xpose.msra.mxu0 0.0
        %229 = vmatprep.subr.mxu0 0.0
        %230 = vmatpush1.xpose.msra.mxu0 0.0
        %231 = vmatprep.subr.mxu0 0.0
        %232 = vmatpush1.xpose.msra.mxu0 0.0
        %233 = vmatprep.subr.mxu0 0.0
        %234 = vmatpush1.xpose.msra.mxu0 0.0
        %235 = vmatprep.subr.mxu0 0.0
        %236 = vmatpush1.xpose.msra.mxu0 0.0
        %237 = vmatprep.subr.mxu0 0.0
        %238 = vmatpush1.xpose.msra.mxu0 0.0
        %239 = vmatprep.subr.mxu0 0.0
        %240 = vmatpush1.xpose.msra.mxu0 0.0
        %241 = vmatprep.subr.mxu0 0.0
        %242 = vmatpush1.xpose.msra.mxu0 0.0
        %243 = vmatprep.subr.mxu0 0.0
        %244 = vmatpush1.xpose.msra.mxu0 0.0
        %245 = vmatprep.subr.mxu0 0.0
        %246 = vmatpush1.xpose.msra.mxu0 %v213
        %247 = vmatprep.subr.mxu0 0.0
        %248 = vmatpush2.xpose.msra.mxu0 0.0
        %249 = vmatprep.subr.mxu0 0.0
        %250 = vmatpush2.xpose.msra.mxu0 0.0
        %251 = vmatprep.subr.mxu0 0.0
        %252 = vmatpush2.xpose.msra.mxu0 0.0
        %253 = vmatprep.subr.mxu0 0.0
        %254 = vmatpush2.xpose.msra.mxu0 0.0
        %255 = vmatprep.subr.mxu0 0.0
        %256 = vmatpush2.xpose.msra.mxu0 0.0
        %257 = vmatprep.subr.mxu0 0.0
        %258 = vmatpush2.xpose.msra.mxu0 0.0
        %259 = vmatprep.subr.mxu0 0.0
        %260 = vmatpush2.xpose.msra.mxu0 0.0
        %261 = vmatprep.subr.mxu0 0.0
        %262 = vmatpush2.xpose.msra.mxu0 0.0
        %263 = vmatprep.subr.mxu0 0.0
        %264 = vmatpush2.xpose.msra.mxu0 0.0
        %265 = vmatprep.subr.mxu0 0.0
        %266 = vmatpush2.xpose.msra.mxu0 0.0
        %267 = vmatprep.subr.mxu0 0.0
        %268 = vmatpush2.xpose.msra.mxu0 0.0
        %269 = vmatprep.subr.mxu0 0.0
        %270 = vmatpush2.xpose.msra.mxu0 0.0
        %271 = vmatprep.subr.mxu0 0.0
        %272 = vmatpush2.xpose.msra.mxu0 0.0
        %273 = vmatprep.subr.mxu0 0.0
        %274 = vmatpush2.xpose.msra.mxu0 0.0
        %275 = vmatprep.subr.mxu0 0.0
        %276 = vmatpush2.xpose.msra.mxu0 0.0
        %277 = vmatprep.subr.mxu0 0.0
        %278 = vmatpush2.xpose.msra.mxu0 0.0
        %279 = vmatprep.mubr.f32.mxu0 0.0
        %280 = vmatmul.mubr.f32.gmra.mxu0 %v210
        %v281 = vpop.f32.mrf.mxu0
        %v282 = vadd.f32 %v206, %v281
        %v283 = vpop.f32.mrf.mxu0
        %284 = vdwg.mxu0
        %vm285 = vcmask 15360
        %286 = vst.msk [vmem:[%s198] sm:$0xff] %vm285, %v282
        %p287 = scmp.lt.s32.totalorder %s18, 1
        %s288 = scalar_select %p287, %s18, 1
        %s289 = smul.addr %s288, 8
        %s290 = scalar_lea.vmem %s3, %s289
        // Predicated region
        $region41: #{tpu_custom_call.1} parent=31 // pred_check
          %p291 = pneg %p104
        $region42: #{tpu_custom_call.1} parent=31 // pred_check_branch
          %293 = sbr.rel (%p291) target = $region44
        $region43: #{tpu_custom_call.1} parent=31 // pred_region
          _
        $region44: #{tpu_custom_call.1} parent=31 // pred_fallthru
          _
      $region32: #{tpu_custom_call.1} parent=5 // pred_fallthru
        _
      %p294 = scmp.le.s32.totalorder 2, %s13
      // Predicated region
      $region45: #{tpu_custom_call.1} parent=5 // pred_check
        %p295 = pneg %p294
      $region46: #{tpu_custom_call.1} parent=5 // pred_check_branch
        %297 = sbr.rel (%p295) target = $region48
      $region47: #{tpu_custom_call.1} parent=5 // pred_region
        %s298 = ssub.s32 %s13, 2
        // Predicated region
        $region49: #{tpu_custom_call.1} parent=47 // pred_check
          %p299 = pneg %p110
        $region50: #{tpu_custom_call.1} parent=47 // pred_check_branch
          %301 = sbr.rel (%p299) target = $region52
        $region51: #{tpu_custom_call.1} parent=47 // pred_region
          %p302 = scmp.lt.s32.totalorder %s19, 1
          %s303 = scalar_select %p302, %s19, 1
          %s304 = smul.addr %s303, 8
          %s305 = scalar_lea.vmem %s3, %s304
        $region52: #{tpu_custom_call.1} parent=47 // pred_fallthru
          _
      $region48: #{tpu_custom_call.1} parent=5 // pred_fallthru
        _
    $region6: #{tpu_custom_call.1} parent=1 // loop_footer
      %s17 = sadd.s32 1, %s13
    $region7: #{tpu_custom_call.1} parent=1 // loop_footer_branch
      %12 = sbr.rel target = $region3
    $region8: #{tpu_custom_call.1} parent=1 // loop_exit
      _
    %306 = vsyncpa [#allocation3], 1
    %s307 = scalar_lea.sflag [#allocation3], 1
    %308 = vsyncpa %s307, 1
    %309 = vsyncpa [#allocation5], 1

</llo_original>
